<compile_context>
chip_gen: v6e
topology: v6e:2x2x1
jax: 0.10.0
libtpu: 0.0.40
codegen_flags: <defaults>
</compile_context>

<pallas_src>
import functools

import jax
import jax.numpy as jnp
from jax import lax
from jax.experimental import pallas as pl
from jax.experimental.pallas import tpu as pltpu


_LANE = 128
_SUBLANE = 8


def _round_up(x, m):
    return ((x + m - 1) // m) * m


def _cdiv(a, b):
    return (a + b - 1) // b


def _softplus(x):
    # Numerically stable softplus built only from exp/log (guaranteed Mosaic
    # lowerings): softplus(x) = max(x, 0) + log(1 + exp(-|x|)).
    return jnp.maximum(x, 0.0) + jnp.log(1.0 + jnp.exp(-jnp.abs(x)))


def _neg_term_kernel(n_ref, out_ref, *, adv_temperature, batch, block_rows):
    """Per row-block partial sum of the negative-score term.

    non-adv : sum_ij softplus(n_ij)                         (valid rows only)
    adv     : sum_i  sum_j softmax(n*T)_ij * softplus(n_ij)
              computed as num_i / den_i without materialising the softmax.
    """
    i = pl.program_id(0)
    row0 = i * block_rows

    n = n_ref[...].astype(jnp.float32)                         # (TB, N)
    tb = n.shape[0]
    # Rows past the true batch (ragged trailing block) contain unspecified
    # data; every reduction that crosses rows is masked with row_valid, and
    # per-row garbage (even inf/nan) is discarded by the jnp.where select.
    row_valid = (lax.broadcasted_iota(jnp.int32, (tb, 1), 0) + row0) < batch

    sp_n = _softplus(n)

    if adv_temperature is not None:
        # Self-adversarial weighting without materialising w = softmax(...):
        #   num_i = sum_j e_ij * softplus(n_ij),  den_i = sum_j e_ij
        logits = n * jnp.float32(adv_temperature)
        m = jnp.max(logits, axis=-1, keepdims=True)            # (TB, 1)
        e = jnp.exp(logits - m)
        num = jnp.sum(e * sp_n, axis=-1, keepdims=True)        # (TB, 1)
        den = jnp.sum(e, axis=-1, keepdims=True)                # (TB, 1)
        row_term = num * pl.reciprocal(den, approx=False)
        part_sum = jnp.sum(jnp.where(row_valid, row_term, 0.0))
    else:
        row_sum = jnp.sum(sp_n, axis=-1, keepdims=True)         # (TB, 1)
        part_sum = jnp.sum(jnp.where(row_valid, row_sum, 0.0))

    # Lane-dense (1, 1, 128) partial-sum store; the wrapper reads lane 0.
    out_ref[...] = jnp.full(out_ref.shape, part_sum, jnp.float32)


def _vmem_capacity_bytes():
    try:
        return int(pltpu.get_tpu_info().vmem_capacity_bytes)
    except Exception:
        return 64 << 20   # be conservative (assume v7x-sized VMEM)


def softplus_loss(p_score, n_score, adv_temperature=None):
    """Pallas TPU implementation of SoftplusLoss.forward."""
    n2 = n_score.reshape(-1, n_score.shape[-1])                 # (B, N), native dtype
    B, N = n2.shape

    # ---- positive term: only B elements -> plain JAX (not worth a grid) ----
    term_p = jnp.mean(jax.nn.softplus(-p_score.astype(jnp.float32)))

    # ---- tile sizing (generation aware, budget-driven) ---------------------
    itemsize = jnp.dtype(n2.dtype).itemsize
    row_bytes = _round_up(N, _LANE) * itemsize                  # VMEM lane-padded row
    vmem_cap = _vmem_capacity_bytes()
    if vmem_cap >= (96 << 20):        # v5e / v6e: 128 MiB VMEM
        tile_budget = 24 << 20        # double-buffered n stream budget
    else:                             # v7x: 64 MiB VMEM
        tile_budget = 14 << 20
    max_rows = max(_SUBLANE,
                   (tile_budget // (2 * row_bytes)) // _SUBLANE * _SUBLANE)
    tb = min(max_rows, _round_up(B, _SUBLANE))

    # Megacore: keep >= 2 row blocks when each half still yields a tile big
    # enough (>= ~2 MiB) to amortise per-grid-step overhead.
    half_rows = _round_up(max(_cdiv(B, 2), 1), _SUBLANE)
    if half_rows * row_bytes >= (2 << 20):
        tb = min(tb, half_rows)

    if tb >= B:
        tb = B                        # single block == full row dim (no OOB rows)
    num_blocks = _cdiv(B, tb)

    kernel = functools.partial(_neg_term_kernel,
                               adv_temperature=adv_temperature,
                               batch=B, block_rows=tb)

    # Explicit VMEM budget: double-buffered n tile + tiny outputs + slack.
    n_block_bytes = tb * row_bytes
    vmem_limit = int(min(max(2 * n_block_bytes + (2 << 20), 4 << 20), 40 << 20))

    if adv_temperature is not None:
        transcendentals = 3 * B * N
        flops = 12 * B * N
    else:
        transcendentals = 2 * B * N
        flops = 8 * B * N
    cost = pl.CostEstimate(
        flops=int(flops),
        transcendentals=int(transcendentals),
        bytes_accessed=int(itemsize * B * N + 4 * num_blocks * _LANE))

    partials = pl.pallas_call(
        kernel,
        out_shape=jax.ShapeDtypeStruct((num_blocks, 1, _LANE), jnp.float32),
        grid_spec=pltpu.PrefetchScalarGridSpec(
            num_scalar_prefetch=0,
            grid=(num_blocks,),
            in_specs=[pl.BlockSpec((tb, N), lambda i: (i, 0))],   # full-N last dim
            out_specs=pl.BlockSpec((1, 1, _LANE), lambda i: (i, 0, 0)),
        ),
        compiler_params=pltpu.CompilerParams(
            dimension_semantics=("parallel",),
            vmem_limit_bytes=vmem_limit),
        cost_estimate=cost,
    )(n2)

    n_total = jnp.sum(partials[:, 0, 0])
    if adv_temperature is not None:
        term_n = n_total / B
    else:
        term_n = n_total / (B * N)
    return 0.5 * (term_p + term_n)


def _reference(p_score, n_score, adv_temperature=None):
    sp = jax.nn.softplus
    if adv_temperature is not None:
        w = jax.nn.softmax(n_score * adv_temperature, axis=-1)
        return (sp(-p_score).mean()
                + (w * sp(n_score)).sum(axis=-1).mean()) / 2.0
    return (sp(-p_score).mean() + sp(n_score).mean()) / 2.0


if __name__ == "__main__":
    key = jax.random.PRNGKey(0)
    kp, kn = jax.random.split(key)

    # Small, module-consistent shapes; B and N intentionally not multiples of
    # 8 / 128 to exercise the ragged-block masking (no wrapper-side padding).
    B, N = 13, 37
    p_score = jax.random.normal(kp, (B, 1), dtype=jnp.float32) * 3.0
    n_score = jax.random.normal(kn, (B, N), dtype=jnp.float32) * 3.0

    # Default module config: adv_temperature=None
    loss_plain = softplus_loss(p_score, n_score, adv_temperature=None)
    jax.block_until_ready(loss_plain)
    ref_plain = _reference(p_score, n_score, None)
    assert jnp.allclose(loss_plain, ref_plain, atol=1e-5, rtol=1e-5), (
        loss_plain, ref_plain)

    # Self-adversarial mode (adv_temperature is a fixed, non-trainable scalar)
    adv_T = 2.0
    loss_adv = softplus_loss(p_score, n_score, adv_temperature=adv_T)
    jax.block_until_ready(loss_adv)
    ref_adv = _reference(p_score, n_score, adv_T)
    assert jnp.allclose(loss_adv, ref_adv, atol=1e-5, rtol=1e-5), (
        loss_adv, ref_adv)

    print("KERNEL_OK")
</pallas_src>

<mosaic_0001>
module attributes {stable_mosaic.version = 11 : i64} {
  func.func @_neg_term_kernel(%arg0: i32, %arg1: memref<13x37xf32, #tpu.memory_space<vmem>>, %arg2: memref<1x1x128xf32, #tpu.memory_space<vmem>>) attributes {dimension_semantics = [#tpu.dimension_semantics<parallel>], iteration_bounds = array<i64: 1>, scalar_prefetch = 0 : i64, scratch_operands = 0 : i64, tpu.core_type = #tpu.core_type<tc>, window_params = [{transform_indices = @transform_0, window_bounds = array<i64: 13, 37>}, {transform_indices = @transform_1, window_bounds = array<i64: 1, 1, 128>}]} {
    %c13_i32 = arith.constant 13 : i32
    %0 = arith.muli %arg0, %c13_i32 : i32
    %c0 = arith.constant 0 : index
    %c0_0 = arith.constant 0 : index
    %1 = vector.load %arg1[%c0, %c0_0] : memref<13x37xf32, #tpu.memory_space<vmem>>, vector<13x37xf32>
    %2 = tpu.iota {dimensions = array<i32: 0>} : vector<13x1xi32>
    %3 = vector.broadcast %0 : i32 to vector<13x1xi32>
    %4 = arith.addi %2, %3 : vector<13x1xi32>
    %c13_i32_1 = arith.constant 13 : i32
    %5 = vector.broadcast %c13_i32_1 : i32 to vector<13x1xi32>
    %6 = arith.cmpi slt, %4, %5 : vector<13x1xi32>
    %cst = arith.constant 0.000000e+00 : f32
    %7 = vector.broadcast %cst : f32 to vector<13x37xf32>
    %8 = arith.maximumf %1, %7 : vector<13x37xf32>
    %9 = math.absf %1 : vector<13x37xf32>
    %cst_2 = arith.constant 0.000000e+00 : f32
    %10 = vector.broadcast %cst_2 : f32 to vector<13x37xf32>
    %11 = arith.subf %10, %9 : vector<13x37xf32>
    %12 = math.exp %11 : vector<13x37xf32>
    %cst_3 = arith.constant 1.000000e+00 : f32
    %13 = vector.broadcast %cst_3 : f32 to vector<13x37xf32>
    %14 = arith.addf %13, %12 : vector<13x37xf32>
    %15 = math.log %14 : vector<13x37xf32>
    %16 = arith.addf %8, %15 : vector<13x37xf32>
    %cst_4 = arith.constant dense<0.000000e+00> : vector<13xf32>
    %17 = vector.multi_reduction <add>, %16, %cst_4 [1] : vector<13x37xf32> to vector<13xf32>
    %18 = vector.shape_cast %17 : vector<13xf32> to vector<13x1xf32>
    %cst_5 = arith.constant 0.000000e+00 : f32
    %19 = vector.broadcast %cst_5 : f32 to vector<13x1xf32>
    %20 = arith.select %6, %18, %19 : vector<13x1xi1>, vector<13x1xf32>
    %21 = vector.shape_cast %20 : vector<13x1xf32> to vector<1x13x1xf32>
    %cst_6 = arith.constant dense<0.000000e+00> : vector<1xf32>
    %22 = vector.multi_reduction <add>, %21, %cst_6 [1, 2] : vector<1x13x1xf32> to vector<1xf32>
    %23 = vector.shape_cast %22 : vector<1xf32> to vector<1x1x1xf32>
    %24 = vector.extract %23[0, 0, 0] : f32 from vector<1x1x1xf32>
    %25 = vector.broadcast %24 : f32 to vector<1x1x128xf32>
    %c0_7 = arith.constant 0 : index
    %c0_8 = arith.constant 0 : index
    %c0_9 = arith.constant 0 : index
    %26 = vector.load %arg2[%c0_7, %c0_8, %c0_9] : memref<1x1x128xf32, #tpu.memory_space<vmem>>, vector<1x1x128xf32>
    tpu.vector_store %arg2[%c0_7, %c0_8, %c0_9], %25 {strides = array<i32>} : memref<1x1x128xf32, #tpu.memory_space<vmem>>, vector<1x1x128xf32>,
    return
  }
  func.func @transform_0(%arg0: i32) -> (i32, i32) {
    %c0_i32 = arith.constant 0 : i32
    %c0_i32_0 = arith.constant 0 : i32
    return %arg0, %c0_i32 : i32, i32
  }
  func.func @transform_1(%arg0: i32) -> (i32, i32, i32) {
    %c0_i32 = arith.constant 0 : i32
    %c0_i32_0 = arith.constant 0 : i32
    %c0_i32_1 = arith.constant 0 : i32
    return %arg0, %c0_i32, %c0_i32_0 : i32, i32, i32
  }
}

</mosaic_0001>

<llo_original>
// kernel: tpu_custom_call.1
$region0: #{tpu_custom_call.1}
  #allocation0 [shape = 'u32[]', space=smem, size = 0x4, offset = 0x4, fixed_abs, tag = 'smem constant byte address 0x4 - core index']
  #allocation1 [shape = 'u32[144,128]{1,0:T(1,128)}', space=vmem, size = 0x12000, scoped, tag = 'internal scratch']
  %s0 = inlined_call_operand.hbm [shape: f32[13,37], index: 0, kind: input, shape index: {}]
  %s1 = inlined_call_operand.hbm [shape: f32[1,1,128], index: 1, kind: output, shape index: {}]
  %s2 = sld [smem:[#allocation0]]
  $region18: #{tpu_custom_call.1} parent=0
    _
  %s4 = ssub.s32 1, %s2
  %s5 = scalar_select 0, %s4, %s2
  $region1: #{tpu_custom_call.1} parent=0
    #allocation2 [shape = 'u8[8192]{0}', space=vmem, size = 0x2000, scoped, tag = 'input window, operand 0, single buffered']
    #allocation3 [shape = 's32[1]{0}', space=sflag, size = 0x4, scoped, tag = 'scoped memory for tpu_custom_call.1']
    #allocation4 [shape = 's32[1]{0}', space=sflag, size = 0x4, scoped, tag = 'scoped memory for tpu_custom_call.1']
    #allocation5 [shape = 'u8[512]{0}', space=vmem, size = 0x400, scoped, tag = 'output window, operand 0, single buffered']
    %6 = vsyncpa [#allocation3], 0
    %7 = vsyncpa [#allocation4], 0
    // Predicated region
    $region2: #{tpu_custom_call.1} parent=1 // pred_check
      _
    $region3: #{tpu_custom_call.1} parent=1 // pred_check_branch
      %9 = sbr.rel (0) target = $region5
    $region4: #{tpu_custom_call.1} parent=1 // pred_region
      %s11 = ssub.s32 256, 256
      %12 = vsyncadd [#allocation3], %s11
      %s13 = sshll.u32 [#allocation2], 4
      %s14 = int_to_ptr.vmem [resolvable:$true] %s13
      %19 = dma.hbm_to_vmem [thread:$0]  %s0, 256, %s14, [#allocation3], 128, 128, 8
    $region5: #{tpu_custom_call.1} parent=1 // pred_fallthru
      _
    // Predicated region
    $region6: #{tpu_custom_call.1} parent=1 // pred_check
      _
    $region7: #{tpu_custom_call.1} parent=1 // pred_check_branch
      %21 = sbr.rel (0) target = $region9
    $region8: #{tpu_custom_call.1} parent=1 // pred_region
      %22 = dma.done [#allocation3], 256
    $region9: #{tpu_custom_call.1} parent=1 // pred_fallthru
      _
    %s23 = smul.u32 0, 13
    %v24 = vld [vmem:[#allocation2] sm:$0xff]
    %v25 = vld [vmem:[#allocation2 + $0x8] sm:$0x1f]
    %v26 = vlaneseq
    %v27 = vshrl.u32 %v26, 7
    %v28 = vadd.s32 %v27, 8
    %v29 = vstv %s23
    %v30 = vadd.s32 %v27, %v29
    %v31 = vadd.s32 %v28, %v29
    %vm32 = vcmp.lt.s32.totalorder %v30, 13
    %vm33 = vcmp.lt.s32.totalorder %v31, 13
    %v34 = vmax.f32 %v24, 0.0
    %v35 = vmax.f32 %v25, 0.0
    %v36 = vand.u32 2147483647, %v24
    %v37 = vand.u32 2147483647, %v25
    %v38 = vsub.f32 0.0, %v36
    %v39 = vsub.f32 0.0, %v37
    %v40 = vmul.f32 %v38, 1.442695
    %v41 = vpow.pop %v40
    %v42 = vmul.f32 %v39, 1.442695
    %v43 = vpow.pop %v42
    %v44 = vadd.f32 %v41, 1.0
    %v45 = vadd.f32 %v43, 1.0
    %v46 = vlog2.pop %v44
    %v47 = vmul.f32 %v46, 0.6931472
    %v48 = vlog2.pop %v45
    %v49 = vmul.f32 %v48, 0.6931472
    %v50 = vadd.f32 %v34, %v47
    %v51 = vadd.f32 %v35, %v49
    %vm52 = vcmask 302080
    %v53 = vsel %vm52, %v50, 0.0
    %54 = vadd.xlane.f32.xlu0 %v53
    %v55 = vpop.xlane.xlu0 %54
    %vm56 = vcmask 299008
    %v57 = vsel %vm56, %v51, 0.0
    %58 = vadd.xlane.f32.xlu0 %v57
    %v59 = vpop.xlane.xlu0 %58
    %v60 = vsel %vm32, %v55, 0.0
    %v61 = vsel %vm33, %v59, 0.0
    %vm62 = vcmask 7168
    %v63 = vsel %vm62, %v60, 0.0
    %vm64 = vcmask 4096
    %v65 = vsel %vm64, %v61, 0.0
    %v66 = vadd.f32 %v63, %v65
    %67 = vadd.xlane.f32.xlu0 %v66
    %v68 = vpop.xlane.xlu0 %67
    %v69 = vrot.slane %v68, 4
    %v70 = vadd.f32 %v68, %v69
    %v71 = vrot.slane %v70, 2
    %v72 = vadd.f32 %v70, %v71
    %v73 = vrot.slane %v72, 1
    %v74 = vadd.f32 %v72, %v73
    %s75 = vtos %v74
    %v76 = vstv %s75
    %77 = vst [vmem:[#allocation5] sm:$0x1] %v76
    // Predicated region
    $region10: #{tpu_custom_call.1} parent=1 // pred_check
      _
    $region11: #{tpu_custom_call.1} parent=1 // pred_check_branch
      %79 = sbr.rel (0) target = $region13
    $region12: #{tpu_custom_call.1} parent=1 // pred_region
      %s81 = ssub.s32 16, 16
      %82 = vsyncadd [#allocation4], %s81
      %s84 = sshll.u32 [#allocation5], 4
      %s85 = int_to_ptr.vmem [resolvable:$true] %s84
      %87 = dma.vmem_to_hbm [thread:$0]  %s85, 16, %s1, [#allocation4]
    $region13: #{tpu_custom_call.1} parent=1 // pred_fallthru
      _
    // Predicated region
    $region14: #{tpu_custom_call.1} parent=1 // pred_check
      _
    $region15: #{tpu_custom_call.1} parent=1 // pred_check_branch
      %89 = sbr.rel (0) target = $region17
    $region16: #{tpu_custom_call.1} parent=1 // pred_region
      %90 = dma.done [#allocation4], 16
    $region17: #{tpu_custom_call.1} parent=1 // pred_fallthru
      _
    %91 = vsyncpa [#allocation3], 1
    %92 = vsyncpa [#allocation4], 1

</llo_original>
